<compile_context>
chip_gen: v7x
topology: tpu7x:2x2x1
jax: 0.10.0
libtpu: 0.0.40
codegen_flags: <defaults>
</compile_context>

<pallas_src>
import functools

import jax
import jax.numpy as jnp
import numpy as np
from jax.experimental import pallas as pl
from jax.experimental.pallas import tpu as pltpu

_LANES = 128
_SUBLANES = 8


def _round_up(x, m):
    return (x + m - 1) // m * m


def _itemsize(dt):
    return jnp.dtype(dt).itemsize


def _vmem_capacity_bytes():
    """Generation-aware physical VMEM (128 MiB v5e/v6e, 64 MiB per-core v7x)."""
    try:
        return int(pltpu.get_tpu_info().vmem_capacity_bytes)
    except Exception:
        return 64 * 1024 * 1024  # conservative fallback (v7x per-TensorCore VMEM)


# ---------------------------------------------------------------------------
# Small/medium classnum: centers resident in VMEM, gathered via one-hot MXU matmul.
# ---------------------------------------------------------------------------
def _reg_loss_kernel_onehot(lbl_ref, w_ref, mu_ref, lv_ref, out_ref, *,
                            tb, num_classes, batch, masked):
    i = pl.program_id(0)

    w = w_ref[...]                          # (C, D), native dtype for a single-pass MXU dot
    mu = mu_ref[...].astype(jnp.float32)    # (TB, D)
    lv = lv_ref[...].astype(jnp.float32)    # (TB, D)
    lbl = lbl_ref[...]                      # (TB, 1) int32

    # One-hot gather of the center rows on the MXU, in W's dtype (exact: one-hot is 0/1).
    class_ids = jax.lax.broadcasted_iota(jnp.int32, (tb, num_classes), 1)
    onehot = (lbl == class_ids).astype(w.dtype)                         # (TB, C)
    wg = jnp.dot(onehot, w, preferred_element_type=jnp.float32)         # (TB, D) f32

    diff = wg - mu
    fit = (diff * diff) / (1e-10 + jnp.exp(lv))   # exact guarded divide (module semantics)
    reg = (fit + lv) * 0.5

    if masked:  # zero padded rows (batch padded up to a multiple of TB)
        row = i * tb + jax.lax.broadcasted_iota(jnp.int32, (tb, 1), 0)
        reg = jnp.where(row < batch, reg, 0.0)

    partial = jnp.sum(reg)                                   # one tree reduction per tile
    out_ref[...] = jnp.broadcast_to(partial, (1, _LANES))    # lane-dense partial-sum row


# ---------------------------------------------------------------------------
# Large classnum: in-kernel gather.  Labels live in SMEM (scalar prefetch), fc_weights
# stays in HBM, per-row DMAs fill a double-buffered (TB, D) VMEM scratch; tile i+1's rows
# are prefetched while tile i is computed.  Requires a sequential ("arbitrary") grid.
# ---------------------------------------------------------------------------
def _reg_loss_kernel_gather(lbl_smem, w_hbm, mu_ref, lv_ref, out_ref,
                            wbuf, sem, *, tb, batch, masked):
    i = pl.program_id(0)
    nt = pl.num_programs(0)
    slot = i % 2

    def issue(tile, slot_):
        base = tile * tb

        @pl.loop(0, tb)
        def _(r):
            pltpu.make_async_copy(
                w_hbm.at[pl.ds(lbl_smem[base + r], 1)],   # (1, D) row of W in HBM
                wbuf.at[slot_, pl.ds(r, 1)],              # (1, D) row of the VMEM scratch
                sem.at[slot_],
            ).start()

    def wait(slot_):
        # Symmetric per-row waits (one per issued copy): robust to the DMA semaphore's
        # completion-accounting granularity.
        @pl.loop(0, tb)
        def _(r):
            pltpu.make_async_copy(
                w_hbm.at[pl.ds(0, 1)],
                wbuf.at[slot_, pl.ds(r, 1)],
                sem.at[slot_],
            ).wait()

    @pl.when(i == 0)
    def _():
        issue(0, 0)                 # prime the first buffer

    @pl.when(i + 1 < nt)
    def _():
        issue(i + 1, 1 - slot)      # prefetch next tile; overlaps current tile's compute

    wait(slot)

    w = wbuf[slot].astype(jnp.float32)      # (TB, D) gathered center rows
    mu = mu_ref[...].astype(jnp.float32)
    lv = lv_ref[...].astype(jnp.float32)

    diff = w - mu
    fit = (diff * diff) / (1e-10 + jnp.exp(lv))
    reg = (fit + lv) * 0.5

    if masked:
        row = i * tb + jax.lax.broadcasted_iota(jnp.int32, (tb, 1), 0)
        reg = jnp.where(row < batch, reg, 0.0)

    partial = jnp.sum(reg)
    out_ref[...] = jnp.broadcast_to(partial, (1, _LANES))


# ---------------------------------------------------------------------------
# Wrapper
# ---------------------------------------------------------------------------
def reg_loss(mu, logvar, labels, fc_weights, *,
             tile_rows=None, max_onehot_classes=2048):
    """Pallas implementation of RegLoss.forward.  Returns a scalar float32."""
    B, D = mu.shape
    C, Dw = fc_weights.shape
    assert Dw == D, "fc_weights must be (classnum, feat_dim)"
    labels = labels.astype(jnp.int32)

    cap = _vmem_capacity_bytes()

    # Batch tile: multiple of 8 sublanes, ~1024 rows by default (large enough to sit on the
    # HBM-roofline plateau), capped so streamed buffers + f32 temporaries fit comfortably.
    if tile_rows is None:
        per_row = D * 4 * 12                      # rough live-VMEM bytes per batch row
        tile_rows = max(8, min(1024, (cap // 3) // max(per_row, 1)))
    tb = _round_up(min(tile_rows, _round_up(B, _SUBLANES)), _SUBLANES)
    num_tiles = (B + tb - 1) // tb
    b_pad = num_tiles * tb

    if b_pad != B:
        pad = b_pad - B
        mu = jnp.pad(mu, ((0, pad), (0, 0)))
        logvar = jnp.pad(logvar, ((0, pad), (0, 0)))
        labels = jnp.pad(labels, (0, pad))        # pads with class 0 (valid row, masked out)
    masked = b_pad != B

    mu_b, lv_b, w_b = _itemsize(mu.dtype), _itemsize(logvar.dtype), _itemsize(fc_weights.dtype)

    out_shape = jax.ShapeDtypeStruct((num_tiles, _LANES), jnp.float32)

    # VMEM accounting.  Pallas double-buffers every BlockSpec input -- including the
    # resident W whose block index never changes -- so W is charged twice.
    stream_bytes = 2 * tb * D * (mu_b + lv_b)           # double-buffered mu / logvar tiles
    temps_bytes = 6 * tb * D * 4                        # f32 elementwise temporaries
    onehot_need = (stream_bytes + temps_bytes
                   + 2 * C * D * w_b                    # resident W (x2 buffers)
                   + tb * C * w_b                       # one-hot intermediate
                   + 2 * tb * _LANES * 4                # labels block (lane-padded)
                   + (2 << 20))
    gather_need = (stream_bytes + temps_bytes
                   + 2 * tb * D * w_b                   # double-buffered gathered rows
                   + (2 << 20))

    use_onehot = (C <= max_onehot_classes) and (onehot_need <= (cap * 7) // 10)

    if use_onehot:
        vmem_limit = int(min(cap, max(onehot_need * 5 // 4, 32 << 20)))
        kernel = functools.partial(_reg_loss_kernel_onehot,
                                   tb=tb, num_classes=C, batch=B, masked=masked)
        partials = pl.pallas_call(
            kernel,
            out_shape=out_shape,
            grid=(num_tiles,),
            in_specs=[
                pl.BlockSpec((tb, 1), lambda i: (i, 0)),   # labels (tiny HBM traffic)
                pl.BlockSpec((C, D), lambda i: (0, 0)),    # centers, resident in VMEM
                pl.BlockSpec((tb, D), lambda i: (i, 0)),   # mu tile
                pl.BlockSpec((tb, D), lambda i: (i, 0)),   # logvar tile
            ],
            out_specs=pl.BlockSpec((1, _LANES), lambda i: (i, 0)),
            compiler_params=pltpu.CompilerParams(
                dimension_semantics=("parallel",),         # lets v7x split tiles over 2 TCs
                vmem_limit_bytes=vmem_limit),
        )(labels.reshape(b_pad, 1), fc_weights, mu, logvar)
    else:
        vmem_limit = int(min(cap, max(gather_need * 5 // 4, 32 << 20)))
        kernel = functools.partial(_reg_loss_kernel_gather,
                                   tb=tb, batch=B, masked=masked)
        grid_spec = pltpu.PrefetchScalarGridSpec(
            num_scalar_prefetch=1,                         # labels -> SMEM
            grid=(num_tiles,),
            in_specs=[
                pl.BlockSpec(memory_space=pl.ANY),             # fc_weights stays in HBM
                pl.BlockSpec((tb, D), lambda i, lbl: (i, 0)),  # mu tile
                pl.BlockSpec((tb, D), lambda i, lbl: (i, 0)),  # logvar tile
            ],
            out_specs=pl.BlockSpec((1, _LANES), lambda i, lbl: (i, 0)),
            scratch_shapes=[
                pltpu.VMEM((2, tb, D), fc_weights.dtype),      # double-buffered W rows
                pltpu.SemaphoreType.DMA((2,)),
            ])
        partials = pl.pallas_call(
            kernel,
            out_shape=out_shape,
            grid_spec=grid_spec,
            compiler_params=pltpu.CompilerParams(
                # Manual double-buffer carries state across grid steps -> sequential grid.
                dimension_semantics=("arbitrary",),
                vmem_limit_bytes=vmem_limit),
        )(labels, fc_weights, mu, logvar)

    # Final sum over tile partials + mean over the (unpadded) batch in the wrapper.
    return jnp.sum(partials[:, 0]) / B


if __name__ == "__main__":
    # Small shapes consistent with the module (classnum x feat_dim weight matrix).
    feat_dim = 128
    classnum = 64
    batch = 8

    key = jax.random.PRNGKey(0)
    k1, k2, k3, k4 = jax.random.split(key, 4)
    fc_weights = jax.random.normal(k1, (classnum, feat_dim), dtype=jnp.float32)
    mu = jax.random.normal(k2, (batch, feat_dim), dtype=jnp.float32)
    logvar = 0.1 * jax.random.normal(k3, (batch, feat_dim), dtype=jnp.float32)
    labels = jax.random.randint(k4, (batch,), 0, classnum, dtype=jnp.int32)

    # Pure-JAX reference.
    w = fc_weights[labels]
    fit = (w - mu) ** 2 / (1e-10 + jnp.exp(logvar))
    ref = jnp.mean(jnp.sum((fit + logvar) / 2.0, axis=1))

    # Path 1: resident centers + one-hot MXU gather (small classnum).
    loss = jax.block_until_ready(reg_loss(mu, logvar, labels, fc_weights))
    assert np.allclose(np.asarray(loss), np.asarray(ref), rtol=1e-5, atol=1e-5), (loss, ref)

    # Path 2: large-classnum path (forced) -- scalar-prefetched labels + in-kernel DMA gather.
    loss2 = jax.block_until_ready(
        reg_loss(mu, logvar, labels, fc_weights, max_onehot_classes=0))
    assert np.allclose(np.asarray(loss2), np.asarray(ref), rtol=1e-5, atol=1e-5), (loss2, ref)

    # Path 2 again with multiple tiles + batch padding, exercising the double-buffered
    # prefetch-next logic and the tail mask.
    batch2 = 20
    mu2 = jax.random.normal(k2, (batch2, feat_dim), dtype=jnp.float32)
    logvar2 = 0.1 * jax.random.normal(k3, (batch2, feat_dim), dtype=jnp.float32)
    labels2 = jax.random.randint(k4, (batch2,), 0, classnum, dtype=jnp.int32)
    w2 = fc_weights[labels2]
    ref2 = jnp.mean(jnp.sum(
        ((w2 - mu2) ** 2 / (1e-10 + jnp.exp(logvar2)) + logvar2) / 2.0, axis=1))
    loss3 = jax.block_until_ready(
        reg_loss(mu2, logvar2, labels2, fc_weights, tile_rows=8, max_onehot_classes=0))
    assert np.allclose(np.asarray(loss3), np.asarray(ref2), rtol=1e-5, atol=1e-5), (loss3, ref2)

    print("KERNEL_OK")
</pallas_src>

<mosaic_0001>
module attributes {stable_mosaic.version = 11 : i64} {
  func.func @_reg_loss_kernel_onehot(%arg0: i32, %arg1: memref<8x1xi32, #tpu.memory_space<vmem>>, %arg2: memref<64x128xf32, #tpu.memory_space<vmem>>, %arg3: memref<8x128xf32, #tpu.memory_space<vmem>>, %arg4: memref<8x128xf32, #tpu.memory_space<vmem>>, %arg5: memref<1x128xf32, #tpu.memory_space<vmem>>) attributes {dimension_semantics = [#tpu.dimension_semantics<parallel>], iteration_bounds = array<i64: 1>, scalar_prefetch = 0 : i64, scratch_operands = 0 : i64, tpu.core_type = #tpu.core_type<tc>, window_params = [{transform_indices = @transform_0, window_bounds = array<i64: 8, 1>}, {pipeline_mode = #tpu.pipeline_mode<synchronous>, transform_indices = @transform_1, window_bounds = array<i64: 64, 128>}, {transform_indices = @transform_2, window_bounds = array<i64: 8, 128>}, {transform_indices = @transform_3, window_bounds = array<i64: 8, 128>}, {transform_indices = @transform_4, window_bounds = array<i64: 1, 128>}]} {
    %c0 = arith.constant 0 : index
    %c0_0 = arith.constant 0 : index
    %0 = vector.load %arg2[%c0, %c0_0] : memref<64x128xf32, #tpu.memory_space<vmem>>, vector<64x128xf32>
    %c0_1 = arith.constant 0 : index
    %c0_2 = arith.constant 0 : index
    %1 = vector.load %arg3[%c0_1, %c0_2] : memref<8x128xf32, #tpu.memory_space<vmem>>, vector<8x128xf32>
    %c0_3 = arith.constant 0 : index
    %c0_4 = arith.constant 0 : index
    %2 = vector.load %arg4[%c0_3, %c0_4] : memref<8x128xf32, #tpu.memory_space<vmem>>, vector<8x128xf32>
    %c0_5 = arith.constant 0 : index
    %c0_6 = arith.constant 0 : index
    %3 = vector.load %arg1[%c0_5, %c0_6] : memref<8x1xi32, #tpu.memory_space<vmem>>, vector<8x1xi32>
    %4 = tpu.iota {dimensions = array<i32: 1>} : vector<8x64xi32>
    %5 = vector.broadcast %3 : vector<8x1xi32> to vector<8x64xi32>
    %6 = arith.cmpi eq, %5, %4 : vector<8x64xi32>
    %7 = arith.extui %6 : vector<8x64xi1> to vector<8x64xi32>
    %8 = arith.sitofp %7 : vector<8x64xi32> to vector<8x64xf32>
    %cst = arith.constant dense<0.000000e+00> : vector<8x128xf32>
    %9 = tpu.matmul %8, %0, %cst {dimension_numbers = #tpu.dot_dimension_numbers<[1], [0], [0], [1], [0, 0, 1, 1], [], []>} : vector<8x64xf32>, vector<64x128xf32>, vector<8x128xf32> -> vector<8x128xf32>
    %10 = arith.subf %9, %1 : vector<8x128xf32>
    %11 = arith.mulf %10, %10 : vector<8x128xf32>
    %12 = math.exp %2 : vector<8x128xf32>
    %cst_7 = arith.constant 1.000000e-10 : f32
    %13 = vector.broadcast %cst_7 : f32 to vector<8x128xf32>
    %14 = arith.addf %13, %12 : vector<8x128xf32>
    %15 = arith.divf %11, %14 : vector<8x128xf32>
    %16 = arith.addf %15, %2 : vector<8x128xf32>
    %cst_8 = arith.constant 5.000000e-01 : f32
    %17 = vector.broadcast %cst_8 : f32 to vector<8x128xf32>
    %18 = arith.mulf %16, %17 : vector<8x128xf32>
    %19 = vector.shape_cast %18 : vector<8x128xf32> to vector<1x8x128xf32>
    %cst_9 = arith.constant dense<0.000000e+00> : vector<1xf32>
    %20 = vector.multi_reduction <add>, %19, %cst_9 [1, 2] : vector<1x8x128xf32> to vector<1xf32>
    %21 = vector.shape_cast %20 : vector<1xf32> to vector<1x1x1xf32>
    %22 = vector.extract %21[0, 0, 0] : f32 from vector<1x1x1xf32>
    %23 = vector.broadcast %22 : f32 to vector<1x128xf32>
    %c0_10 = arith.constant 0 : index
    %c0_11 = arith.constant 0 : index
    %24 = vector.load %arg5[%c0_10, %c0_11] : memref<1x128xf32, #tpu.memory_space<vmem>>, vector<1x128xf32>
    tpu.vector_store %arg5[%c0_10, %c0_11], %23 {strides = array<i32>} : memref<1x128xf32, #tpu.memory_space<vmem>>, vector<1x128xf32>,
    return
  }
  func.func @transform_0(%arg0: i32) -> (i32, i32) {
    %c0_i32 = arith.constant 0 : i32
    %c0_i32_0 = arith.constant 0 : i32
    return %arg0, %c0_i32 : i32, i32
  }
  func.func @transform_1(%arg0: i32) -> (i32, i32) {
    %c0_i32 = arith.constant 0 : i32
    %c0_i32_0 = arith.constant 0 : i32
    %c0_i32_1 = arith.constant 0 : i32
    return %c0_i32, %c0_i32_0 : i32, i32
  }
  func.func @transform_2(%arg0: i32) -> (i32, i32) {
    %c0_i32 = arith.constant 0 : i32
    %c0_i32_0 = arith.constant 0 : i32
    return %arg0, %c0_i32 : i32, i32
  }
  func.func @transform_3(%arg0: i32) -> (i32, i32) {
    %c0_i32 = arith.constant 0 : i32
    %c0_i32_0 = arith.constant 0 : i32
    return %arg0, %c0_i32 : i32, i32
  }
  func.func @transform_4(%arg0: i32) -> (i32, i32) {
    %c0_i32 = arith.constant 0 : i32
    %c0_i32_0 = arith.constant 0 : i32
    return %arg0, %c0_i32 : i32, i32
  }
}

</mosaic_0001>

<llo_original>
// kernel: tpu_custom_call.1
$region0: #{tpu_custom_call.1}
  #allocation0 [shape = 'u32[]', space=smem, size = 0x4, offset = 0x4, fixed_abs, tag = 'smem constant byte address 0x4 - core index']
  #allocation1 [shape = 'u32[144,128]{1,0:T(1,128)}', space=vmem, size = 0x12000, scoped, tag = 'internal scratch']
  %s0 = inlined_call_operand.vmem [shape: s32[8,1], index: 0, kind: input, shape index: {}]
  %s1 = inlined_call_operand.hbm [shape: f32[64,128], index: 1, kind: input, shape index: {}]
  %s2 = inlined_call_operand.vmem [shape: f32[8,128], index: 2, kind: input, shape index: {}]
  %s3 = inlined_call_operand.vmem [shape: f32[8,128], index: 3, kind: input, shape index: {}]
  %s4 = inlined_call_operand.hbm [shape: f32[1,128], index: 4, kind: output, shape index: {}]
  %s5 = sld [smem:[#allocation0]]
  $region30: #{tpu_custom_call.1} parent=0
    _
  %s7 = ssub.s32 1, %s5
  %s8 = scalar_select 0, %s7, %s5
  $region1: #{tpu_custom_call.1} parent=0
    #allocation2 [shape = 'u8[32768]{0}', space=vmem, size = 0x8000, scoped, tag = 'input window, operand 1, single buffered']
    #allocation3 [shape = 's32[1]{0}', space=sflag, size = 0x4, scoped, tag = 'scoped memory for tpu_custom_call.1']
    #allocation4 [shape = 's32[1]{0}', space=sflag, size = 0x4, scoped, tag = 'scoped memory for tpu_custom_call.1']
    #allocation5 [shape = 'u8[512]{0}', space=vmem, size = 0x400, scoped, tag = 'output window, operand 0, single buffered']
    %9 = vsyncpa [#allocation3], 0
    %10 = vsyncpa [#allocation4], 0
    // Predicated region
    $region2: #{tpu_custom_call.1} parent=1 // pred_check
      _
    $region3: #{tpu_custom_call.1} parent=1 // pred_check_branch
      %12 = sbr.rel (0) target = $region5
    $region4: #{tpu_custom_call.1} parent=1 // pred_region
      _
    $region5: #{tpu_custom_call.1} parent=1 // pred_fallthru
      _
    // Predicated region
    $region6: #{tpu_custom_call.1} parent=1 // pred_check
      _
    $region7: #{tpu_custom_call.1} parent=1 // pred_check_branch
      %14 = sbr.rel (0) target = $region9
    $region8: #{tpu_custom_call.1} parent=1 // pred_region
      %s16 = ssub.s32 1024, 1024
      %17 = vsyncadd [#allocation3], %s16
      %s18 = sshll.u32 [#allocation2], 4
      %s19 = int_to_ptr.vmem [resolvable:$true] %s18
      %24 = dma.hbm_to_vmem [thread:$0]  %s1, 1024, %s19, [#allocation3], 128, 128, 8
    $region9: #{tpu_custom_call.1} parent=1 // pred_fallthru
      _
    // Predicated region
    $region10: #{tpu_custom_call.1} parent=1 // pred_check
      _
    $region11: #{tpu_custom_call.1} parent=1 // pred_check_branch
      %26 = sbr.rel (0) target = $region13
    $region12: #{tpu_custom_call.1} parent=1 // pred_region
      _
    $region13: #{tpu_custom_call.1} parent=1 // pred_fallthru
      _
    // Predicated region
    $region14: #{tpu_custom_call.1} parent=1 // pred_check
      _
    $region15: #{tpu_custom_call.1} parent=1 // pred_check_branch
      %28 = sbr.rel (0) target = $region17
    $region16: #{tpu_custom_call.1} parent=1 // pred_region
      _
    $region17: #{tpu_custom_call.1} parent=1 // pred_fallthru
      _
    // Predicated region
    $region18: #{tpu_custom_call.1} parent=1 // pred_check
      _
    $region19: #{tpu_custom_call.1} parent=1 // pred_check_branch
      %30 = sbr.rel (0) target = $region21
    $region20: #{tpu_custom_call.1} parent=1 // pred_region
      %31 = dma.done [#allocation3], 1024
    $region21: #{tpu_custom_call.1} parent=1 // pred_fallthru
      _
    %v32 = vld [vmem:[#allocation2] sm:$0xff]
    %v33 = vld [vmem:[#allocation2 + $0x8] sm:$0xff]
    %v34 = vld [vmem:[#allocation2 + $0x10] sm:$0xff]
    %v35 = vld [vmem:[#allocation2 + $0x18] sm:$0xff]
    %v36 = vld [vmem:[#allocation2 + $0x20] sm:$0xff]
    %v37 = vld [vmem:[#allocation2 + $0x28] sm:$0xff]
    %v38 = vld [vmem:[#allocation2 + $0x30] sm:$0xff]
    %v39 = vld [vmem:[#allocation2 + $0x38] sm:$0xff]
    %v40 = vld [vmem:[%s2] sm:$0xff]
    %v41 = vld [vmem:[%s3] sm:$0xff]
    %v42 = vld [vmem:[%s0] sm:$0xff]
    %v43 = vlaneseq
    %v44 = vand.u32 %v43, 127
    %45 = vset.pattern.permute.xlu0 0
    %46 = vperm.xlu0 %45, %v42
    %v47 = vpop.permute.xlu0 %46
    %vm48 = vcmp.eq.s32.totalorder %v47, %v44
    %v49 = vsel %vm48, 1, 0
    %v50 = vcvt.s32.f32 %v49
    %vm51 = vcmask 523264
    %v53 = vsel %vm51, %v50, 0
    %55 = vmatprep.subr.mxu0 0.0
    %56 = vmatpush1.msra.mxu0 %v32
    %57 = vmatprep.subr.mxu0 0.0
    %58 = vmatpush1.msra.mxu0 %v33
    %59 = vmatprep.subr.mxu0 0.0
    %60 = vmatpush1.msra.mxu0 %v34
    %61 = vmatprep.subr.mxu0 0.0
    %62 = vmatpush1.msra.mxu0 %v35
    %63 = vmatprep.subr.mxu0 0.0
    %64 = vmatpush1.msra.mxu0 %v36
    %65 = vmatprep.subr.mxu0 0.0
    %66 = vmatpush1.msra.mxu0 %v37
    %67 = vmatprep.subr.mxu0 0.0
    %68 = vmatpush1.msra.mxu0 %v38
    %69 = vmatprep.subr.mxu0 0.0
    %70 = vmatpush1.msra.mxu0 %v39
    %71 = vmatprep.subr.mxu0 0.0
    %72 = vmatpush1.msra.mxu0 0.0
    %73 = vmatprep.subr.mxu0 0.0
    %74 = vmatpush1.msra.mxu0 0.0
    %75 = vmatprep.subr.mxu0 0.0
    %76 = vmatpush1.msra.mxu0 0.0
    %77 = vmatprep.subr.mxu0 0.0
    %78 = vmatpush1.msra.mxu0 0.0
    %79 = vmatprep.subr.mxu0 0.0
    %80 = vmatpush1.msra.mxu0 0.0
    %81 = vmatprep.subr.mxu0 0.0
    %82 = vmatpush1.msra.mxu0 0.0
    %83 = vmatprep.subr.mxu0 0.0
    %84 = vmatpush1.msra.mxu0 0.0
    %85 = vmatprep.subr.mxu0 0.0
    %86 = vmatpush1.msra.mxu0 0.0
    %87 = vmatprep.subr.mxu0 0.0
    %88 = vmatpush1.msra.mxu0 0.0
    %89 = vmatprep.subr.mxu0 0.0
    %90 = vmatpush1.msra.mxu0 0.0
    %91 = vmatprep.subr.mxu0 0.0
    %92 = vmatpush1.msra.mxu0 0.0
    %93 = vmatprep.subr.mxu0 0.0
    %94 = vmatpush1.msra.mxu0 0.0
    %95 = vmatprep.subr.mxu0 0.0
    %96 = vmatpush1.msra.mxu0 0.0
    %97 = vmatprep.subr.mxu0 0.0
    %98 = vmatpush1.msra.mxu0 0.0
    %99 = vmatprep.subr.mxu0 0.0
    %100 = vmatpush1.msra.mxu0 0.0
    %101 = vmatprep.subr.mxu0 0.0
    %102 = vmatpush1.msra.mxu0 0.0
    %103 = vmatprep.subr.mxu0 0.0
    %104 = vmatpush1.msra.mxu0 0.0
    %105 = vmatprep.subr.mxu0 0.0
    %106 = vmatpush1.msra.mxu0 0.0
    %107 = vmatprep.subr.mxu0 0.0
    %108 = vmatpush1.msra.mxu0 0.0
    %109 = vmatprep.subr.mxu0 0.0
    %110 = vmatpush1.msra.mxu0 0.0
    %111 = vmatprep.subr.mxu0 0.0
    %112 = vmatpush1.msra.mxu0 0.0
    %113 = vmatprep.subr.mxu0 0.0
    %114 = vmatpush1.msra.mxu0 0.0
    %115 = vmatprep.subr.mxu0 0.0
    %116 = vmatpush1.msra.mxu0 0.0
    %117 = vmatprep.subr.mxu0 0.0
    %118 = vmatpush1.msra.mxu0 0.0
    %119 = vmatprep.mubr.f32.mxu0 0.0
    %120 = vmatmul.mubr.f32.gmra.mrb[0].mxu0 %v53
    %v121 = vpop.f32.mrb[0].mxu0
    %v122 = vadd.f32 0.0, %v121
    %v123 = vpop.f32.mrb[0].mxu0
    %124 = vdwg.mxu0
    %v125 = vsub.f32 %v122, %v40
    %v126 = vmul.f32 %v125, %v125
    %v127 = vmul.f32 %v41, 1.442695
    %v128 = vpow.pop %v127
    %v129 = vadd.f32 %v128, 1e-10
    %v130 = vrcp.pop %v129
    %v131 = vmul.f32 %v126, %v130
    %v132 = vadd.f32 %v131, %v41
    %v133 = vmul.f32 %v132, 0.5
    %134 = vadd.xlane.f32.xlu0 %v133
    %v135 = vpop.xlane.xlu0 %134
    %v136 = vrot.slane %v135, 4
    %v137 = vadd.f32 %v135, %v136
    %v138 = vrot.slane %v137, 2
    %v139 = vadd.f32 %v137, %v138
    %v140 = vrot.slane %v139, 1
    %v141 = vadd.f32 %v139, %v140
    %s142 = vtos %v141
    %v143 = vstv %s142
    %144 = vst [vmem:[#allocation5] sm:$0x1] %v143
    // Predicated region
    $region22: #{tpu_custom_call.1} parent=1 // pred_check
      _
    $region23: #{tpu_custom_call.1} parent=1 // pred_check_branch
      %146 = sbr.rel (0) target = $region25
    $region24: #{tpu_custom_call.1} parent=1 // pred_region
      %s148 = ssub.s32 16, 16
      %149 = vsyncadd [#allocation4], %s148
      %s151 = sshll.u32 [#allocation5], 4
      %s152 = int_to_ptr.vmem [resolvable:$true] %s151
      %154 = dma.vmem_to_hbm [thread:$0]  %s152, 16, %s4, [#allocation4]
    $region25: #{tpu_custom_call.1} parent=1 // pred_fallthru
      _
    // Predicated region
    $region26: #{tpu_custom_call.1} parent=1 // pred_check
      _
    $region27: #{tpu_custom_call.1} parent=1 // pred_check_branch
      %156 = sbr.rel (0) target = $region29
    $region28: #{tpu_custom_call.1} parent=1 // pred_region
      %157 = dma.done [#allocation4], 16
    $region29: #{tpu_custom_call.1} parent=1 // pred_fallthru
      _
    %158 = vsyncpa [#allocation3], 1
    %159 = vsyncpa [#allocation4], 1

</llo_original>
